<compile_context>
chip_gen: v7x
topology: tpu7x:2x2x1
jax: 0.10.0
libtpu: 0.0.40
codegen_flags: <defaults>
</compile_context>

<pallas_src>
import jax
import jax.numpy as jnp
from jax.experimental import pallas as pl
from jax.experimental.pallas import tpu as pltpu

_MIN_TILE = 256  # MXU M-dimension target on v6e/v7x (also fine on v5e)


def dqn_mlp_kernel(x_ref, w1_ref, b1_ref, w2_ref, b2_ref, w3_ref, b3_ref, o_ref):
    # fc1 + ReLU  (bf16 MXU inputs, f32 accumulation, f32 epilogue)
    h1 = jnp.dot(x_ref[...].astype(jnp.bfloat16), w1_ref[...],
                 preferred_element_type=jnp.float32)
    h1 = jnp.maximum(h1 + b1_ref[...], 0.0)
    # fc2 + ReLU
    h2 = jnp.dot(h1.astype(jnp.bfloat16), w2_ref[...],
                 preferred_element_type=jnp.float32)
    h2 = jnp.maximum(h2 + b2_ref[...], 0.0)
    # fc3 (Q-values; lane dim pre-padded to a 128 multiple -> unmasked vst;
    # stored in bf16 to halve output HBM writeback)
    out = jnp.dot(h2.astype(jnp.bfloat16), w3_ref[...],
                  preferred_element_type=jnp.float32)
    o_ref[...] = (out + b3_ref[...]).astype(o_ref.dtype)


def dqn_forward(x, params, output_size, *, tile_b=1024):
    """x: (B, input_size) f32 (or bf16). params = (w1,b1,w2,b2,w3,b3) from
    init_params (weights (in,out) bf16, biases (1,out) f32, last layer already
    lane-padded to a 128 multiple). Returns (B, output_size) f32 Q-values."""
    w1, b1, w2, b2, w3, b3 = params
    B, in_size = x.shape
    hidden1, hidden2 = w1.shape[1], w2.shape[1]
    out_pad = w3.shape[1]                      # padded at init to a 128 multiple
    assert output_size <= out_pad

    if B <= _MIN_TILE:
        # Single tile; round the tile (and x) up to a multiple of 16 for clean
        # bf16 sublane packing.  Pads at most 14 rows -> negligible copy.
        tile_b = 16 * pl.cdiv(B, 16)
        b_rows = tile_b
        if b_rows != B:
            x = jnp.pad(x, ((0, b_rows - B), (0, 0)))
    else:
        # No wrapper-side pad of x: Pallas masks the partial last block.
        req = max(_MIN_TILE, _MIN_TILE * (tile_b // _MIN_TILE))      # mult of 256
        half = _MIN_TILE * pl.cdiv(pl.cdiv(B, 2), _MIN_TILE)         # ~B/2, mult of 256
        tile_b = min(req, half)   # v7x: keep >= 2 grid steps for the 2 TCs
        b_rows = B

    grid = (pl.cdiv(b_rows, tile_b),)
    const = lambda i: (0, 0)      # weights/biases resident across all batch tiles

    flops = 2 * b_rows * (in_size * hidden1 + hidden1 * hidden2 + hidden2 * out_pad)
    param_bytes = sum(int(a.size) * a.dtype.itemsize for a in params)
    bytes_accessed = int(x.size) * x.dtype.itemsize + param_bytes + b_rows * out_pad * 2

    # Raise the scoped-VMEM limit only if the per-tile footprint needs it
    # (matters on v5e's 16 MiB default when tile_b is pushed very high).
    vmem_est = (
        2 * tile_b * in_size * x.dtype.itemsize        # x, double-buffered
        + 2 * tile_b * out_pad * 2                     # bf16 out, double-buffered
        + tile_b * (hidden1 * 6 + hidden2 * 6 + out_pad * 4)  # f32+bf16 intermediates
        + 2 * param_bytes
    )
    vmem_limit = None
    if vmem_est > 12 * 1024 * 1024:
        vmem_limit = min(int(vmem_est * 3 // 2), 64 * 1024 * 1024)

    out_padded = pl.pallas_call(
        dqn_mlp_kernel,
        out_shape=jax.ShapeDtypeStruct((b_rows, out_pad), jnp.bfloat16),
        grid=grid,
        in_specs=[
            pl.BlockSpec((tile_b, in_size), lambda i: (i, 0)),  # x: tiled over batch
            pl.BlockSpec(w1.shape, const),
            pl.BlockSpec(b1.shape, const),
            pl.BlockSpec(w2.shape, const),
            pl.BlockSpec(b2.shape, const),
            pl.BlockSpec(w3.shape, const),
            pl.BlockSpec(b3.shape, const),
        ],
        out_specs=pl.BlockSpec((tile_b, out_pad), lambda i: (i, 0)),
        compiler_params=pltpu.CompilerParams(
            dimension_semantics=("parallel",),      # v7x: shard batch grid across TCs
            vmem_limit_bytes=vmem_limit),
        cost_estimate=pl.CostEstimate(
            flops=flops, transcendentals=0, bytes_accessed=bytes_accessed),
    )(x, w1, b1, w2, b2, w3, b3)

    # Tiny slice+cast over (B, output_size) only; kernel writeback stays bf16.
    return out_padded[:B, :output_size].astype(jnp.float32)


def init_params(key, input_size, output_size, *, weight_dtype=jnp.bfloat16):
    """Mimics PyTorch nn.Linear default init (uniform +/- 1/sqrt(fan_in)).
    Weights stored pre-transposed (in, out) in bf16; biases (1, out) f32.
    The last layer is lane-padded ONCE here to a multiple of 128."""
    dims = [(input_size, 128), (128, 64), (64, output_size)]
    params = []
    for li, (fan_in, fan_out) in enumerate(dims):
        key, kw, kb = jax.random.split(key, 3)
        bound = 1.0 / (fan_in ** 0.5)
        w = jax.random.uniform(kw, (fan_in, fan_out), jnp.float32, -bound, bound)
        b = jax.random.uniform(kb, (1, fan_out), jnp.float32, -bound, bound)
        if li == len(dims) - 1:
            out_pad = 128 * pl.cdiv(fan_out, 128)
            if out_pad != fan_out:
                w = jnp.pad(w, ((0, 0), (0, out_pad - fan_out)))
                b = jnp.pad(b, ((0, 0), (0, out_pad - fan_out)))
        params += [w.astype(weight_dtype), b]
    return tuple(params)


def ref_forward(x, params, output_size):
    """Plain-JAX reference matching the kernel's bf16-input / f32-accumulate math."""
    w1, b1, w2, b2, w3, b3 = params

    def bf(v):
        return v.astype(jnp.bfloat16).astype(jnp.float32)

    h = jnp.maximum(bf(x) @ bf(w1) + b1, 0.0)
    h = jnp.maximum(bf(h) @ bf(w2) + b2, 0.0)
    return (bf(h) @ bf(w3) + b3)[:, :output_size]


if __name__ == "__main__":
    input_size = 32   # state dimension
    output_size = 8   # number of actions
    batch = 2

    key = jax.random.PRNGKey(0)
    key, kx = jax.random.split(key)
    x = jax.random.normal(kx, (batch, input_size), jnp.float32)
    params = init_params(key, input_size, output_size)

    # Small-batch (single 16-row tile) path.
    q_values = dqn_forward(x, params, output_size)
    jax.block_until_ready(q_values)
    ref = ref_forward(x, params, output_size)
    assert q_values.shape == (batch, output_size)
    assert jnp.allclose(q_values, ref, atol=2e-2, rtol=2e-2), \
        float(jnp.max(jnp.abs(q_values - ref)))

    # Multi-tile grid path: no wrapper pad of x, partial last block masked by
    # Pallas, weights resident across 3 grid steps.
    key, kx2 = jax.random.split(key)
    x_big = jax.random.normal(kx2, (600, input_size), jnp.float32)
    q_big = dqn_forward(x_big, params, output_size, tile_b=256)
    jax.block_until_ready(q_big)
    ref_big = ref_forward(x_big, params, output_size)
    assert q_big.shape == (600, output_size)
    assert jnp.allclose(q_big, ref_big, atol=2e-2, rtol=2e-2), \
        float(jnp.max(jnp.abs(q_big - ref_big)))

    print("KERNEL_OK")
</pallas_src>

<mosaic_0001>
module attributes {stable_mosaic.version = 11 : i64} {
  func.func @dqn_mlp_kernel(%arg0: i32, %arg1: memref<16x32xf32, #tpu.memory_space<vmem>>, %arg2: memref<32x128xbf16, #tpu.memory_space<vmem>>, %arg3: memref<1x128xf32, #tpu.memory_space<vmem>>, %arg4: memref<128x64xbf16, #tpu.memory_space<vmem>>, %arg5: memref<1x64xf32, #tpu.memory_space<vmem>>, %arg6: memref<64x128xbf16, #tpu.memory_space<vmem>>, %arg7: memref<1x128xf32, #tpu.memory_space<vmem>>, %arg8: memref<16x128xbf16, #tpu.memory_space<vmem>>) attributes {dimension_semantics = [#tpu.dimension_semantics<parallel>], iteration_bounds = array<i64: 1>, scalar_prefetch = 0 : i64, scratch_operands = 0 : i64, tpu.core_type = #tpu.core_type<tc>, window_params = [{transform_indices = @transform_0, window_bounds = array<i64: 16, 32>}, {pipeline_mode = #tpu.pipeline_mode<synchronous>, transform_indices = @transform_1, window_bounds = array<i64: 32, 128>}, {pipeline_mode = #tpu.pipeline_mode<synchronous>, transform_indices = @transform_2, window_bounds = array<i64: 1, 128>}, {pipeline_mode = #tpu.pipeline_mode<synchronous>, transform_indices = @transform_3, window_bounds = array<i64: 128, 64>}, {pipeline_mode = #tpu.pipeline_mode<synchronous>, transform_indices = @transform_4, window_bounds = array<i64: 1, 64>}, {pipeline_mode = #tpu.pipeline_mode<synchronous>, transform_indices = @transform_5, window_bounds = array<i64: 64, 128>}, {pipeline_mode = #tpu.pipeline_mode<synchronous>, transform_indices = @transform_6, window_bounds = array<i64: 1, 128>}, {transform_indices = @transform_7, window_bounds = array<i64: 16, 128>}]} {
    %c0 = arith.constant 0 : index
    %c0_0 = arith.constant 0 : index
    %0 = vector.load %arg1[%c0, %c0_0] : memref<16x32xf32, #tpu.memory_space<vmem>>, vector<16x32xf32>
    %1 = arith.truncf %0 : vector<16x32xf32> to vector<16x32xbf16>
    %c0_1 = arith.constant 0 : index
    %c0_2 = arith.constant 0 : index
    %2 = vector.load %arg2[%c0_1, %c0_2] : memref<32x128xbf16, #tpu.memory_space<vmem>>, vector<32x128xbf16>
    %cst = arith.constant dense<0.000000e+00> : vector<16x128xf32>
    %3 = tpu.matmul %1, %2, %cst {dimension_numbers = #tpu.dot_dimension_numbers<[1], [0], [0], [1], [0, 0, 1, 1], [], []>} : vector<16x32xbf16>, vector<32x128xbf16>, vector<16x128xf32> -> vector<16x128xf32>
    %c0_3 = arith.constant 0 : index
    %c0_4 = arith.constant 0 : index
    %4 = vector.load %arg3[%c0_3, %c0_4] : memref<1x128xf32, #tpu.memory_space<vmem>>, vector<1x128xf32>
    %5 = vector.broadcast %4 : vector<1x128xf32> to vector<16x128xf32>
    %6 = arith.addf %3, %5 : vector<16x128xf32>
    %cst_5 = arith.constant 0.000000e+00 : f32
    %7 = vector.broadcast %cst_5 : f32 to vector<16x128xf32>
    %8 = arith.maximumf %6, %7 : vector<16x128xf32>
    %9 = arith.truncf %8 : vector<16x128xf32> to vector<16x128xbf16>
    %c0_6 = arith.constant 0 : index
    %c0_7 = arith.constant 0 : index
    %10 = vector.load %arg4[%c0_6, %c0_7] : memref<128x64xbf16, #tpu.memory_space<vmem>>, vector<128x64xbf16>
    %cst_8 = arith.constant dense<0.000000e+00> : vector<16x64xf32>
    %11 = tpu.matmul %9, %10, %cst_8 {dimension_numbers = #tpu.dot_dimension_numbers<[1], [0], [0], [1], [0, 0, 1, 1], [], []>} : vector<16x128xbf16>, vector<128x64xbf16>, vector<16x64xf32> -> vector<16x64xf32>
    %c0_9 = arith.constant 0 : index
    %c0_10 = arith.constant 0 : index
    %12 = vector.load %arg5[%c0_9, %c0_10] : memref<1x64xf32, #tpu.memory_space<vmem>>, vector<1x64xf32>
    %13 = vector.broadcast %12 : vector<1x64xf32> to vector<16x64xf32>
    %14 = arith.addf %11, %13 : vector<16x64xf32>
    %cst_11 = arith.constant 0.000000e+00 : f32
    %15 = vector.broadcast %cst_11 : f32 to vector<16x64xf32>
    %16 = arith.maximumf %14, %15 : vector<16x64xf32>
    %17 = arith.truncf %16 : vector<16x64xf32> to vector<16x64xbf16>
    %c0_12 = arith.constant 0 : index
    %c0_13 = arith.constant 0 : index
    %18 = vector.load %arg6[%c0_12, %c0_13] : memref<64x128xbf16, #tpu.memory_space<vmem>>, vector<64x128xbf16>
    %cst_14 = arith.constant dense<0.000000e+00> : vector<16x128xf32>
    %19 = tpu.matmul %17, %18, %cst_14 {dimension_numbers = #tpu.dot_dimension_numbers<[1], [0], [0], [1], [0, 0, 1, 1], [], []>} : vector<16x64xbf16>, vector<64x128xbf16>, vector<16x128xf32> -> vector<16x128xf32>
    %c0_15 = arith.constant 0 : index
    %c0_16 = arith.constant 0 : index
    %20 = vector.load %arg7[%c0_15, %c0_16] : memref<1x128xf32, #tpu.memory_space<vmem>>, vector<1x128xf32>
    %21 = vector.broadcast %20 : vector<1x128xf32> to vector<16x128xf32>
    %22 = arith.addf %19, %21 : vector<16x128xf32>
    %23 = arith.truncf %22 : vector<16x128xf32> to vector<16x128xbf16>
    %c0_17 = arith.constant 0 : index
    %c0_18 = arith.constant 0 : index
    %24 = vector.load %arg8[%c0_17, %c0_18] : memref<16x128xbf16, #tpu.memory_space<vmem>>, vector<16x128xbf16>
    tpu.vector_store %arg8[%c0_17, %c0_18], %23 {strides = array<i32>} : memref<16x128xbf16, #tpu.memory_space<vmem>>, vector<16x128xbf16>,
    return
  }
  func.func @transform_0(%arg0: i32) -> (i32, i32) {
    %c0_i32 = arith.constant 0 : i32
    %c0_i32_0 = arith.constant 0 : i32
    return %arg0, %c0_i32 : i32, i32
  }
  func.func @transform_1(%arg0: i32) -> (i32, i32) {
    %c0_i32 = arith.constant 0 : i32
    %c0_i32_0 = arith.constant 0 : i32
    %c0_i32_1 = arith.constant 0 : i32
    return %c0_i32, %c0_i32_0 : i32, i32
  }
  func.func @transform_2(%arg0: i32) -> (i32, i32) {
    %c0_i32 = arith.constant 0 : i32
    %c0_i32_0 = arith.constant 0 : i32
    %c0_i32_1 = arith.constant 0 : i32
    return %c0_i32, %c0_i32_0 : i32, i32
  }
  func.func @transform_3(%arg0: i32) -> (i32, i32) {
    %c0_i32 = arith.constant 0 : i32
    %c0_i32_0 = arith.constant 0 : i32
    %c0_i32_1 = arith.constant 0 : i32
    return %c0_i32, %c0_i32_0 : i32, i32
  }
  func.func @transform_4(%arg0: i32) -> (i32, i32) {
    %c0_i32 = arith.constant 0 : i32
    %c0_i32_0 = arith.constant 0 : i32
    %c0_i32_1 = arith.constant 0 : i32
    return %c0_i32, %c0_i32_0 : i32, i32
  }
  func.func @transform_5(%arg0: i32) -> (i32, i32) {
    %c0_i32 = arith.constant 0 : i32
    %c0_i32_0 = arith.constant 0 : i32
    %c0_i32_1 = arith.constant 0 : i32
    return %c0_i32, %c0_i32_0 : i32, i32
  }
  func.func @transform_6(%arg0: i32) -> (i32, i32) {
    %c0_i32 = arith.constant 0 : i32
    %c0_i32_0 = arith.constant 0 : i32
    %c0_i32_1 = arith.constant 0 : i32
    return %c0_i32, %c0_i32_0 : i32, i32
  }
  func.func @transform_7(%arg0: i32) -> (i32, i32) {
    %c0_i32 = arith.constant 0 : i32
    %c0_i32_0 = arith.constant 0 : i32
    return %arg0, %c0_i32 : i32, i32
  }
}

</mosaic_0001>

<llo_original>
// kernel: tpu_custom_call.1
$region0: #{tpu_custom_call.1}
  #allocation0 [shape = 'u32[]', space=smem, size = 0x4, offset = 0x4, fixed_abs, tag = 'smem constant byte address 0x4 - core index']
  #allocation1 [shape = 'u32[144,128]{1,0:T(1,128)}', space=vmem, size = 0x12000, scoped, tag = 'internal scratch']
  %s0 = inlined_call_operand.vmem [shape: f32[16,32], index: 0, kind: input, shape index: {}]
  %s1 = inlined_call_operand.vmem [shape: bf16[32,128], index: 1, kind: input, shape index: {}]
  %s2 = inlined_call_operand.vmem [shape: f32[1,128], index: 2, kind: input, shape index: {}]
  %s3 = inlined_call_operand.vmem [shape: bf16[128,64], index: 3, kind: input, shape index: {}]
  %s4 = inlined_call_operand.vmem [shape: f32[1,64], index: 4, kind: input, shape index: {}]
  %s5 = inlined_call_operand.vmem [shape: bf16[64,128], index: 5, kind: input, shape index: {}]
  %s6 = inlined_call_operand.vmem [shape: f32[1,128], index: 6, kind: input, shape index: {}]
  %s7 = inlined_call_operand.hbm [shape: bf16[16,128], index: 7, kind: output, shape index: {}]
  %s8 = sld [smem:[#allocation0]]
  $region38: #{tpu_custom_call.1} parent=0
    _
  %s10 = ssub.s32 1, %s8
  %s11 = scalar_select 0, %s10, %s8
  $region1: #{tpu_custom_call.1} parent=0
    #allocation2 [shape = 'u8[4096]{0}', space=vmem, size = 0x1000, scoped, tag = 'output window, operand 0, single buffered']
    #allocation3 [shape = 's32[1]{0}', space=sflag, size = 0x4, scoped, tag = 'scoped memory for tpu_custom_call.1']
    %12 = vsyncpa [#allocation3], 0
    // Predicated region
    $region2: #{tpu_custom_call.1} parent=1 // pred_check
      _
    $region3: #{tpu_custom_call.1} parent=1 // pred_check_branch
      %14 = sbr.rel (0) target = $region5
    $region4: #{tpu_custom_call.1} parent=1 // pred_region
      _
    $region5: #{tpu_custom_call.1} parent=1 // pred_fallthru
      _
    // Predicated region
    $region6: #{tpu_custom_call.1} parent=1 // pred_check
      _
    $region7: #{tpu_custom_call.1} parent=1 // pred_check_branch
      %16 = sbr.rel (0) target = $region9
    $region8: #{tpu_custom_call.1} parent=1 // pred_region
      _
    $region9: #{tpu_custom_call.1} parent=1 // pred_fallthru
      _
    // Predicated region
    $region10: #{tpu_custom_call.1} parent=1 // pred_check
      _
    $region11: #{tpu_custom_call.1} parent=1 // pred_check_branch
      %18 = sbr.rel (0) target = $region13
    $region12: #{tpu_custom_call.1} parent=1 // pred_region
      _
    $region13: #{tpu_custom_call.1} parent=1 // pred_fallthru
      _
    // Predicated region
    $region14: #{tpu_custom_call.1} parent=1 // pred_check
      _
    $region15: #{tpu_custom_call.1} parent=1 // pred_check_branch
      %20 = sbr.rel (0) target = $region17
    $region16: #{tpu_custom_call.1} parent=1 // pred_region
      _
    $region17: #{tpu_custom_call.1} parent=1 // pred_fallthru
      _
    // Predicated region
    $region18: #{tpu_custom_call.1} parent=1 // pred_check
      _
    $region19: #{tpu_custom_call.1} parent=1 // pred_check_branch
      %22 = sbr.rel (0) target = $region21
    $region20: #{tpu_custom_call.1} parent=1 // pred_region
      _
    $region21: #{tpu_custom_call.1} parent=1 // pred_fallthru
      _
    // Predicated region
    $region22: #{tpu_custom_call.1} parent=1 // pred_check
      _
    $region23: #{tpu_custom_call.1} parent=1 // pred_check_branch
      %24 = sbr.rel (0) target = $region25
    $region24: #{tpu_custom_call.1} parent=1 // pred_region
      _
    $region25: #{tpu_custom_call.1} parent=1 // pred_fallthru
      _
    // Predicated region
    $region26: #{tpu_custom_call.1} parent=1 // pred_check
      _
    $region27: #{tpu_custom_call.1} parent=1 // pred_check_branch
      %26 = sbr.rel (0) target = $region29
    $region28: #{tpu_custom_call.1} parent=1 // pred_region
      _
    $region29: #{tpu_custom_call.1} parent=1 // pred_fallthru
      _
    %v28 = vld [vmem:[%s0] sm:$0xff]
    %v29 = vld [vmem:[%s0 + $0x8] sm:$0xff]
    %v30 = vpack.c.bf16 %v29, %v28
    %v31 = vld [vmem:[%s1] sm:$0xf]
    %v32 = vld [vmem:[%s1 + $0x4] sm:$0xf]
    %v33 = vld [vmem:[%s1 + $0x8] sm:$0xf]
    %v34 = vld [vmem:[%s1 + $0xc] sm:$0xf]
    %v35 = vld [vmem:[%s2] sm:$0x1]
    %v37 = vlaneseq
    %v38 = vshrl.u32 %v37, 7
    %v39 = vsub.s32 0, %v38
    %v40 = vrot.slane %v35, %v39
    %v46 = vunpack.c.l.b16 %v31
    %v47 = vunpack.c.l.b16 %v32
    %v48 = vunpack.c.l.b16 %v33
    %v49 = vunpack.c.l.b16 %v34
    %v50 = vpack.c.b16 %v47, %v46
    %v51 = vpack.c.b16 %v49, %v48
    %vm54 = vcmask 261120
    %v56 = vsel %vm54, %v30, 0
    %58 = vmatprep.subr.bf16.mxu0 0
    %59 = vmatpush1.bf16.msra.mxu0 %v50
    %60 = vmatprep.subr.bf16.mxu0 0
    %61 = vmatpush1.bf16.msra.mxu0 %v51
    %62 = vmatprep.subr.bf16.mxu0 0
    %63 = vmatpush1.bf16.msra.mxu0 0
    %64 = vmatprep.subr.bf16.mxu0 0
    %65 = vmatpush1.bf16.msra.mxu0 0
    %66 = vmatprep.subr.bf16.mxu0 0
    %67 = vmatpush1.bf16.msra.mxu0 0
    %68 = vmatprep.subr.bf16.mxu0 0
    %69 = vmatpush1.bf16.msra.mxu0 0
    %70 = vmatprep.subr.bf16.mxu0 0
    %71 = vmatpush1.bf16.msra.mxu0 0
    %72 = vmatprep.subr.bf16.mxu0 0
    %73 = vmatpush1.bf16.msra.mxu0 0
    %74 = vmatprep.subr.bf16.mxu0 0
    %75 = vmatpush1.bf16.msra.mxu0 0
    %76 = vmatprep.subr.bf16.mxu0 0
    %77 = vmatpush1.bf16.msra.mxu0 0
    %78 = vmatprep.subr.bf16.mxu0 0
    %79 = vmatpush1.bf16.msra.mxu0 0
    %80 = vmatprep.subr.bf16.mxu0 0
    %81 = vmatpush1.bf16.msra.mxu0 0
    %82 = vmatprep.subr.bf16.mxu0 0
    %83 = vmatpush1.bf16.msra.mxu0 0
    %84 = vmatprep.subr.bf16.mxu0 0
    %85 = vmatpush1.bf16.msra.mxu0 0
    %86 = vmatprep.subr.bf16.mxu0 0
    %87 = vmatpush1.bf16.msra.mxu0 0
    %88 = vmatprep.subr.bf16.mxu0 0
    %89 = vmatpush1.bf16.msra.mxu0 0
    %90 = vmatprep.mubr.bf16.mxu0 0
    %91 = vmatmul.mubr.bf16.gmra.mrb[0].mxu0 %v56
    %v92 = vpop.f32.mrb[0].mxu0
    %v93 = vadd.f32 %v40, %v92
    %v94 = vpop.f32.mrb[0].mxu0
    %v95 = vpop.f32.mrb[0].mxu0
    %v96 = vadd.f32 %v40, %v95
    %v97 = vpop.f32.mrb[0].mxu0
    %98 = vdwg.mxu0
    %v99 = vmax.f32 %v93, 0.0
    %v100 = vmax.f32 %v96, 0.0
    %v101 = vpack.c.bf16 %v100, %v99
    %v102 = vld [vmem:[%s3] sm:$0xf]
    %v103 = vld [vmem:[%s3 + $0x4] sm:$0xf]
    %v104 = vld [vmem:[%s3 + $0x8] sm:$0xf]
    %v105 = vld [vmem:[%s3 + $0xc] sm:$0xf]
    %v106 = vld [vmem:[%s3 + $0x10] sm:$0xf]
    %v107 = vld [vmem:[%s3 + $0x14] sm:$0xf]
    %v108 = vld [vmem:[%s3 + $0x18] sm:$0xf]
    %v109 = vld [vmem:[%s3 + $0x1c] sm:$0xf]
    %v110 = vld [vmem:[%s3 + $0x20] sm:$0xf]
    %v111 = vld [vmem:[%s3 + $0x24] sm:$0xf]
    %v112 = vld [vmem:[%s3 + $0x28] sm:$0xf]
    %v113 = vld [vmem:[%s3 + $0x2c] sm:$0xf]
    %v114 = vld [vmem:[%s3 + $0x30] sm:$0xf]
    %v115 = vld [vmem:[%s3 + $0x34] sm:$0xf]
    %v116 = vld [vmem:[%s3 + $0x38] sm:$0xf]
    %v117 = vld [vmem:[%s3 + $0x3c] sm:$0xf]
    %v118 = vld [vmem:[%s4] sm:$0x1]
    %v120 = vlaneseq
    %v121 = vshrl.u32 %v120, 7
    %v122 = vsub.s32 0, %v121
    %v123 = vrot.slane %v118, %v122
    %v141 = vunpack.c.l.b16 %v102
    %v142 = vunpack.c.l.b16 %v103
    %v143 = vunpack.c.l.b16 %v104
    %v144 = vunpack.c.l.b16 %v105
    %v145 = vunpack.c.l.b16 %v106
    %v146 = vunpack.c.l.b16 %v107
    %v147 = vunpack.c.l.b16 %v108
    %v148 = vunpack.c.l.b16 %v109
    %v149 = vunpack.c.l.b16 %v110
    %v150 = vunpack.c.l.b16 %v111
    %v151 = vunpack.c.l.b16 %v112
    %v152 = vunpack.c.l.b16 %v113
    %v153 = vunpack.c.l.b16 %v114
    %v154 = vunpack.c.l.b16 %v115
    %v155 = vunpack.c.l.b16 %v116
    %v156 = vunpack.c.l.b16 %v117
    %v157 = vpack.c.b16 %v142, %v141
    %v158 = vpack.c.b16 %v144, %v143
    %v159 = vpack.c.b16 %v146, %v145
    %v160 = vpack.c.b16 %v148, %v147
    %v161 = vpack.c.b16 %v150, %v149
    %v162 = vpack.c.b16 %v152, %v151
    %v163 = vpack.c.b16 %v154, %v153
    %v164 = vpack.c.b16 %v156, %v155
    %173 = vmatprep.subr.bf16.mxu0 0
    %174 = vmatpush1.bf16.msra.mxu0 %v157
    %175 = vmatprep.subr.bf16.mxu0 0
    %176 = vmatpush1.bf16.msra.mxu0 %v158
    %177 = vmatprep.subr.bf16.mxu0 0
    %178 = vmatpush1.bf16.msra.mxu0 %v159
    %179 = vmatprep.subr.bf16.mxu0 0
    %180 = vmatpush1.bf16.msra.mxu0 %v160
    %181 = vmatprep.subr.bf16.mxu0 0
    %182 = vmatpush1.bf16.msra.mxu0 %v161
    %183 = vmatprep.subr.bf16.mxu0 0
    %184 = vmatpush1.bf16.msra.mxu0 %v162
    %185 = vmatprep.subr.bf16.mxu0 0
    %186 = vmatpush1.bf16.msra.mxu0 %v163
    %187 = vmatprep.subr.bf16.mxu0 0
    %188 = vmatpush1.bf16.msra.mxu0 %v164
    %189 = vmatprep.subr.bf16.mxu0 0
    %190 = vmatpush1.bf16.msra.mxu0 0
    %191 = vmatprep.subr.bf16.mxu0 0
    %192 = vmatpush1.bf16.msra.mxu0 0
    %193 = vmatprep.subr.bf16.mxu0 0
    %194 = vmatpush1.bf16.msra.mxu0 0
    %195 = vmatprep.subr.bf16.mxu0 0
    %196 = vmatpush1.bf16.msra.mxu0 0
    %197 = vmatprep.subr.bf16.mxu0 0
    %198 = vmatpush1.bf16.msra.mxu0 0
    %199 = vmatprep.subr.bf16.mxu0 0
    %200 = vmatpush1.bf16.msra.mxu0 0
    %201 = vmatprep.subr.bf16.mxu0 0
    %202 = vmatpush1.bf16.msra.mxu0 0
    %203 = vmatprep.subr.bf16.mxu0 0
    %204 = vmatpush1.bf16.msra.mxu0 0
    %205 = vmatprep.mubr.bf16.mxu0 0
    %206 = vmatmul.mubr.bf16.gmra.mrb[0].mxu0 %v101
    %v207 = vpop.f32.mrb[0].mxu0
    %v208 = vadd.f32 %v123, %v207
    %v209 = vpop.f32.mrb[0].mxu0
    %v210 = vpop.f32.mrb[0].mxu0
    %v211 = vadd.f32 %v123, %v210
    %v212 = vpop.f32.mrb[0].mxu0
    %213 = vdwg.mxu0
    %v214 = vmax.f32 %v208, 0.0
    %v215 = vmax.f32 %v211, 0.0
    %v216 = vpack.c.bf16 %v215, %v214
    %v217 = vld [vmem:[%s5] sm:$0xf]
    %v218 = vld [vmem:[%s5 + $0x4] sm:$0xf]
    %v219 = vld [vmem:[%s5 + $0x8] sm:$0xf]
    %v220 = vld [vmem:[%s5 + $0xc] sm:$0xf]
    %v221 = vld [vmem:[%s5 + $0x10] sm:$0xf]
    %v222 = vld [vmem:[%s5 + $0x14] sm:$0xf]
    %v223 = vld [vmem:[%s5 + $0x18] sm:$0xf]
    %v224 = vld [vmem:[%s5 + $0x1c] sm:$0xf]
    %v225 = vld [vmem:[%s6] sm:$0x1]
    %v227 = vlaneseq
    %v228 = vshrl.u32 %v227, 7
    %v229 = vsub.s32 0, %v228
    %v230 = vrot.slane %v225, %v229
    %v240 = vunpack.c.l.b16 %v217
    %v241 = vunpack.c.l.b16 %v218
    %v242 = vunpack.c.l.b16 %v219
    %v243 = vunpack.c.l.b16 %v220
    %v244 = vunpack.c.l.b16 %v221
    %v245 = vunpack.c.l.b16 %v222
    %v246 = vunpack.c.l.b16 %v223
    %v247 = vunpack.c.l.b16 %v224
    %v248 = vpack.c.b16 %v241, %v240
    %v249 = vpack.c.b16 %v243, %v242
    %v250 = vpack.c.b16 %v245, %v244
    %v251 = vpack.c.b16 %v247, %v246
    %vm256 = vcmask 523264
    %v258 = vsel %vm256, %v216, 0
    %260 = vmatprep.subr.bf16.mxu0 0
    %261 = vmatpush1.bf16.msra.mxu0 %v248
    %262 = vmatprep.subr.bf16.mxu0 0
    %263 = vmatpush1.bf16.msra.mxu0 %v249
    %264 = vmatprep.subr.bf16.mxu0 0
    %265 = vmatpush1.bf16.msra.mxu0 %v250
    %266 = vmatprep.subr.bf16.mxu0 0
    %267 = vmatpush1.bf16.msra.mxu0 %v251
    %268 = vmatprep.subr.bf16.mxu0 0
    %269 = vmatpush1.bf16.msra.mxu0 0
    %270 = vmatprep.subr.bf16.mxu0 0
    %271 = vmatpush1.bf16.msra.mxu0 0
    %272 = vmatprep.subr.bf16.mxu0 0
    %273 = vmatpush1.bf16.msra.mxu0 0
    %274 = vmatprep.subr.bf16.mxu0 0
    %275 = vmatpush1.bf16.msra.mxu0 0
    %276 = vmatprep.subr.bf16.mxu0 0
    %277 = vmatpush1.bf16.msra.mxu0 0
    %278 = vmatprep.subr.bf16.mxu0 0
    %279 = vmatpush1.bf16.msra.mxu0 0
    %280 = vmatprep.subr.bf16.mxu0 0
    %281 = vmatpush1.bf16.msra.mxu0 0
    %282 = vmatprep.subr.bf16.mxu0 0
    %283 = vmatpush1.bf16.msra.mxu0 0
    %284 = vmatprep.subr.bf16.mxu0 0
    %285 = vmatpush1.bf16.msra.mxu0 0
    %286 = vmatprep.subr.bf16.mxu0 0
    %287 = vmatpush1.bf16.msra.mxu0 0
    %288 = vmatprep.subr.bf16.mxu0 0
    %289 = vmatpush1.bf16.msra.mxu0 0
    %290 = vmatprep.subr.bf16.mxu0 0
    %291 = vmatpush1.bf16.msra.mxu0 0
    %292 = vmatprep.mubr.bf16.mxu0 0
    %293 = vmatmul.mubr.bf16.gmra.mrb[0].mxu0 %v258
    %v294 = vpop.f32.mrb[0].mxu0
    %v295 = vadd.f32 %v230, %v294
    %v296 = vpop.f32.mrb[0].mxu0
    %v297 = vpop.f32.mrb[0].mxu0
    %v298 = vadd.f32 %v230, %v297
    %v299 = vpop.f32.mrb[0].mxu0
    %300 = vdwg.mxu0
    %v301 = vpack.c.bf16 %v298, %v295
    %v303 = vunpack.c.l.b16 %v301
    %v304 = vunpack.c.h.b16 %v301
    %v305 = vpack.c.b16 %v303, %v303
    %v306 = vpack.c.b16 %v304, %v304
    %309 = vst [vmem:[#allocation2] sm:$0xf] %v305
    %310 = vst [vmem:[#allocation2 + $0x4] sm:$0xf] %v306
    // Predicated region
    $region30: #{tpu_custom_call.1} parent=1 // pred_check
      _
    $region31: #{tpu_custom_call.1} parent=1 // pred_check_branch
      %312 = sbr.rel (0) target = $region33
    $region32: #{tpu_custom_call.1} parent=1 // pred_region
      %s314 = ssub.s32 128, 128
      %315 = vsyncadd [#allocation3], %s314
      %s316 = sshll.u32 [#allocation2], 4
      %s317 = int_to_ptr.vmem [resolvable:$true] %s316
      %322 = dma.vmem_to_hbm [thread:$0]  %s317, 128, %s7, [#allocation3], 64, 64, 4
    $region33: #{tpu_custom_call.1} parent=1 // pred_fallthru
      _
    // Predicated region
    $region34: #{tpu_custom_call.1} parent=1 // pred_check
      _
    $region35: #{tpu_custom_call.1} parent=1 // pred_check_branch
      %324 = sbr.rel (0) target = $region37
    $region36: #{tpu_custom_call.1} parent=1 // pred_region
      %325 = dma.done [#allocation3], 128
    $region37: #{tpu_custom_call.1} parent=1 // pred_fallthru
      _
    %326 = vsyncpa [#allocation3], 1

</llo_original>
